<compile_context>
chip_gen: v6e
topology: v6e:2x2x1
jax: 0.10.0
libtpu: 0.0.40
codegen_flags: <defaults>
</compile_context>

<pallas_src>
import functools

import jax
import jax.numpy as jnp
from jax.experimental import pallas as pl
from jax.experimental.pallas import tpu as pltpu


_MS_TARGET = 256   # conv output rows per image per strip (dot M = 2*_MS_TARGET <= 512)


def _round_up(x, m):
    return (x + m - 1) // m * m


def _cdiv(a, b):
    return (a + b - 1) // b


# ---------------------------------------------------------------------------
# Fused Pallas kernel: per-(batch, strip) partial sums for
#   (a) sum((relu(conv3x3s2(x_hat)) - relu(conv3x3s2(x)))^2)   [perceptual]
#   (b) sum(|patches_hat - patches|)                            [pixel L1]
# ---------------------------------------------------------------------------
def _combined_kernel(lhs_ref, ph_ref, px_ref, w_ref, b_ref, operc_ref, opix_ref,
                     *, ms, rs):
    """One grid step = (batch element b, strip s).

      lhs_ref : (1, 1, 2*ms, 9*C) bf16  im2col rows; [0:ms]=x_hat rows, [ms:2*ms]=x rows
      ph_ref  : (1, 1, rs, 128)  bf16   flattened patches_hat chunk (zero padded)
      px_ref  : (1, 1, rs, 128)  bf16   flattened patches     chunk (zero padded)
      w_ref   : (9*C, 128) bf16         conv weights, Cout zero-padded to 128
      b_ref   : (1, 128)  f32           conv bias, zero padded
      operc   : (1, 1, 8, 128) f32      perceptual partial sum (vector accumulator)
      opix    : (1, 1, 8, 128) f32      pixel-L1 partial sum   (vector accumulator)
    """
    # --- perceptual: ONE MXU dot (both images stacked along M, 9 taps folded in K) ---
    lhs = lhs_ref[0, 0]                                               # (2*ms, 9*C)
    f = jnp.dot(lhs, w_ref[...], preferred_element_type=jnp.float32)  # (2*ms, 128)
    f = jnp.maximum(f + b_ref[...], 0.0)
    d = f[:ms] - f[ms:]     # zero-padded rows / Cout columns give d == 0 exactly
    sq = d * d                                                        # (ms, 128)
    # Leading-axis sum of (ms//8, 8, 128) = pure vreg adds (no per-row XLU reduce).
    operc_ref[...] = jnp.sum(sq.reshape(ms // 8, 8, 128), axis=0).reshape(1, 1, 8, 128)

    # --- pixel L1 over this strip's patch chunk (bf16 inputs, f32 accumulation) ---
    pd = ph_ref[0, 0].astype(jnp.float32) - px_ref[0, 0].astype(jnp.float32)
    ad = jnp.abs(pd)                                                  # (rs, 128)
    opix_ref[...] = jnp.sum(ad.reshape(rs // 8, 8, 128), axis=0).reshape(1, 1, 8, 128)


# ---------------------------------------------------------------------------
# Wrapper-side data prep (lane-dense im2col-lite slab; one fused XLA copy per image)
# ---------------------------------------------------------------------------
def _im2col_s2_3x3(img_nchw):
    """NCHW -> (B, oh*ow, 9*C) bf16 stride-2 3x3 slab (K is tap-major, channel-minor)."""
    B, C, H, W = img_nchw.shape
    oh = (H - 3) // 2 + 1
    ow = (W - 3) // 2 + 1
    x = jnp.transpose(img_nchw, (0, 2, 3, 1))                        # B, H, W, C
    taps = []
    for ki in range(3):
        for kj in range(3):
            taps.append(x[:, ki:ki + 2 * oh:2, kj:kj + 2 * ow:2, :])  # (B, oh, ow, C)
    cols = jnp.stack(taps, axis=3)                                    # (B, oh, ow, 9, C)
    return cols.reshape(B, oh * ow, 9 * C).astype(jnp.bfloat16), oh, ow


def _prep_conv_params(w, b, c_in):
    kkc, cout = w.shape
    assert kkc == 9 * c_in and cout <= 128
    # w's first axis is (tap, channel) flattened -> matches the im2col K layout.
    w_p = jnp.zeros((9 * c_in, 128), jnp.bfloat16).at[:, :cout].set(
        w.astype(jnp.bfloat16))
    b_p = jnp.zeros((1, 128), jnp.float32).at[0, :cout].set(b.astype(jnp.float32))
    return w_p, b_p, int(cout)


def _vmem_limit_bytes():
    # v5e / v6e: 128 MiB physical -> 96 MiB scoped; v7x: 64 MiB physical -> 48 MiB.
    try:
        cap = int(pltpu.get_tpu_info().vmem_capacity_bytes)
        return int(min(cap * 3 // 4, 96 * 1024 * 1024))
    except Exception:
        return 48 * 1024 * 1024


def _combined_losses(x_hat, x, patches_hat, patches, w, b):
    B, C, H, W = x_hat.shape
    K = 9 * C

    # --- perceptual LHS: im2col-lite slabs, padded to S strips of ms rows each ---
    cols_h, oh, ow = _im2col_s2_3x3(x_hat)
    cols_x, _, _ = _im2col_s2_3x3(x)
    m_valid = oh * ow
    ms = min(_round_up(m_valid, 8), _MS_TARGET)
    n_strips = _cdiv(m_valid, ms)
    m_tot = n_strips * ms
    if m_tot != m_valid:
        cols_h = jnp.pad(cols_h, ((0, 0), (0, m_tot - m_valid), (0, 0)))
        cols_x = jnp.pad(cols_x, ((0, 0), (0, m_tot - m_valid), (0, 0)))
    cols_h = cols_h.reshape(B, n_strips, ms, K)
    cols_x = cols_x.reshape(B, n_strips, ms, K)
    lhs = jnp.concatenate([cols_h, cols_x], axis=2)                   # (B, S, 2*ms, K)

    # --- pixel patches: bf16 (halves DMA), chunked across the same strip axis ---
    n_pix = patches_hat.size // B
    ph_flat = patches_hat.reshape(B, n_pix).astype(jnp.bfloat16)
    px_flat = patches.reshape(B, n_pix).astype(jnp.bfloat16)
    rs = _round_up(_cdiv(_cdiv(n_pix, 128), n_strips), 8)
    n_pad = n_strips * rs * 128
    if n_pad != n_pix:
        ph_flat = jnp.pad(ph_flat, ((0, 0), (0, n_pad - n_pix)))
        px_flat = jnp.pad(px_flat, ((0, 0), (0, n_pad - n_pix)))
    ph_r = ph_flat.reshape(B, n_strips, rs, 128)
    px_r = px_flat.reshape(B, n_strips, rs, 128)

    w_p, b_p, cout = _prep_conv_params(w, b, C)

    kernel = functools.partial(_combined_kernel, ms=ms, rs=rs)

    flops = 2 * B * n_strips * (2 * ms) * K * 128
    bytes_accessed = (lhs.size * 2 + (ph_r.size + px_r.size) * 2
                      + w_p.size * 2 + b_p.size * 4
                      + 2 * B * n_strips * 8 * 128 * 4)
    cost = pl.CostEstimate(flops=int(flops), transcendentals=0,
                           bytes_accessed=int(bytes_accessed))

    grid_spec = pltpu.PrefetchScalarGridSpec(
        num_scalar_prefetch=0,
        grid=(B, n_strips),
        in_specs=[
            pl.BlockSpec((1, 1, 2 * ms, K), lambda bb, ss: (bb, ss, 0, 0)),
            pl.BlockSpec((1, 1, rs, 128), lambda bb, ss: (bb, ss, 0, 0)),
            pl.BlockSpec((1, 1, rs, 128), lambda bb, ss: (bb, ss, 0, 0)),
            pl.BlockSpec((K, 128), lambda bb, ss: (0, 0)),       # resident weights
            pl.BlockSpec((1, 128), lambda bb, ss: (0, 0)),       # resident bias
        ],
        out_specs=(
            pl.BlockSpec((1, 1, 8, 128), lambda bb, ss: (bb, ss, 0, 0)),
            pl.BlockSpec((1, 1, 8, 128), lambda bb, ss: (bb, ss, 0, 0)),
        ),
    )

    perc_part, pix_part = pl.pallas_call(
        kernel,
        out_shape=(jax.ShapeDtypeStruct((B, n_strips, 8, 128), jnp.float32),
                   jax.ShapeDtypeStruct((B, n_strips, 8, 128), jnp.float32)),
        grid_spec=grid_spec,
        compiler_params=pltpu.CompilerParams(
            dimension_semantics=("parallel", "parallel"),
            vmem_limit_bytes=_vmem_limit_bytes(),
        ),
        cost_estimate=cost,
    )(lhs, ph_r, px_r, w_p, b_p)

    pixel_loss = jnp.sum(pix_part) / float(B * n_pix)                       # L1 mean
    perceptual_loss = jnp.sum(perc_part) / float(B * m_valid * cout)        # MSE mean
    return pixel_loss, perceptual_loss


# ---------------------------------------------------------------------------
# CombinedLoss forward (functional; buffers carried as explicit state)
# ---------------------------------------------------------------------------
def init_state(lambda_perceptual=1.0, calibration_steps=10):
    return {
        "lambda_perceptual": jnp.float32(lambda_perceptual),
        "remaining_calibration_steps": jnp.int32(calibration_steps),
        "calibration_points": jnp.zeros((calibration_steps, 2), jnp.float32),
        "pixel_scale": jnp.float32(1.0),
        "perceptual_scale": jnp.float32(1.0),
    }


@jax.jit
def combined_loss_forward(state, params, x_hat, x, patches_hat, patches):
    pixel_loss, perceptual_loss = _combined_losses(
        x_hat, x, patches_hat, patches, params["w"], params["b"])

    remaining = state["remaining_calibration_steps"]
    cal = state["calibration_points"]

    def calibrate(_):
        idx = cal.shape[0] - remaining
        # eps guard: a zero loss during calibration must not produce inf/NaN scales.
        eps = jnp.float32(1e-12)
        point = jnp.stack([1.0 / jnp.maximum(pixel_loss, eps),
                           1.0 / jnp.maximum(perceptual_loss, eps)])
        new_cal = cal.at[idx].set(point)
        nz_rows = jnp.any(new_cal != 0.0, axis=1)
        cnt = jnp.maximum(jnp.sum(nz_rows), 1).astype(jnp.float32)
        scales = jnp.sum(new_cal, axis=0) / cnt
        return new_cal, scales[0], scales[1], remaining - 1

    def skip(_):
        return cal, state["pixel_scale"], state["perceptual_scale"], remaining

    cal, pixel_scale, perceptual_scale, remaining = jax.lax.cond(
        remaining > 0, calibrate, skip, None)

    pixel_loss_s = pixel_scale * pixel_loss
    perceptual_loss_s = state["lambda_perceptual"] * perceptual_scale * perceptual_loss
    combined_loss = pixel_loss_s + perceptual_loss_s

    new_state = {
        "lambda_perceptual": state["lambda_perceptual"],
        "remaining_calibration_steps": remaining,
        "calibration_points": cal,
        "pixel_scale": pixel_scale,
        "perceptual_scale": perceptual_scale,
    }
    return (combined_loss, pixel_loss_s, perceptual_loss_s), new_state


def _to_patches(img_nchw, p=4):
    B, C, H, W = img_nchw.shape
    x = img_nchw.reshape(B, C, H // p, p, W // p, p)
    x = x.transpose(0, 2, 4, 1, 3, 5)                # B, nH, nW, C, p, p
    return x.reshape(B, (H // p) * (W // p), C, p, p)


if __name__ == "__main__":
    key = jax.random.PRNGKey(0)
    k1, k2, k3, k4 = jax.random.split(key, 4)

    B, C, H, W = 2, 4, 16, 16
    COUT, KH, KW = 64, 3, 3

    x = jax.random.normal(k1, (B, C, H, W), jnp.float32)
    x_hat = x + 0.1 * jax.random.normal(k2, (B, C, H, W), jnp.float32)
    patches = _to_patches(x)          # (2, 16, 4, 4, 4)
    patches_hat = _to_patches(x_hat)

    # Deterministic synthetic "SqueezeNet first conv" weights.
    params = {
        "w": 0.05 * jax.random.normal(k3, (KH * KW * C, COUT), jnp.float32),
        "b": 0.01 * jax.random.normal(k4, (COUT,), jnp.float32),
    }

    state = init_state(lambda_perceptual=1.0, calibration_steps=10)
    (combined, pixel, perceptual), new_state = combined_loss_forward(
        state, params, x_hat, x, patches_hat, patches)
    combined = jax.block_until_ready(combined)
    pixel = jax.block_until_ready(pixel)
    perceptual = jax.block_until_ready(perceptual)
    jax.block_until_ready(new_state)

    assert bool(jnp.isfinite(combined)) and bool(jnp.isfinite(pixel)) and bool(
        jnp.isfinite(perceptual))
    print("KERNEL_OK")
</pallas_src>

<mosaic_0001>
module attributes {stable_mosaic.version = 11 : i64} {
  func.func @_combined_kernel(%arg0: i32, %arg1: i32, %arg2: memref<1x1x112x36xbf16, #tpu.memory_space<vmem>>, %arg3: memref<1x1x8x128xbf16, #tpu.memory_space<vmem>>, %arg4: memref<1x1x8x128xbf16, #tpu.memory_space<vmem>>, %arg5: memref<36x128xbf16, #tpu.memory_space<vmem>>, %arg6: memref<1x128xf32, #tpu.memory_space<vmem>>, %arg7: memref<1x1x8x128xf32, #tpu.memory_space<vmem>>, %arg8: memref<1x1x8x128xf32, #tpu.memory_space<vmem>>) attributes {dimension_semantics = [#tpu.dimension_semantics<parallel>, #tpu.dimension_semantics<parallel>], iteration_bounds = array<i64: 2, 1>, scalar_prefetch = 0 : i64, scratch_operands = 0 : i64, tpu.core_type = #tpu.core_type<tc>, window_params = [{transform_indices = @transform_0, window_bounds = array<i64: 1, 1, 112, 36>}, {transform_indices = @transform_1, window_bounds = array<i64: 1, 1, 8, 128>}, {transform_indices = @transform_2, window_bounds = array<i64: 1, 1, 8, 128>}, {pipeline_mode = #tpu.pipeline_mode<synchronous>, transform_indices = @transform_3, window_bounds = array<i64: 36, 128>}, {pipeline_mode = #tpu.pipeline_mode<synchronous>, transform_indices = @transform_4, window_bounds = array<i64: 1, 128>}, {transform_indices = @transform_5, window_bounds = array<i64: 1, 1, 8, 128>}, {transform_indices = @transform_6, window_bounds = array<i64: 1, 1, 8, 128>}]} {
    %c0 = arith.constant 0 : index
    %c0_0 = arith.constant 0 : index
    %c0_1 = arith.constant 0 : index
    %c0_2 = arith.constant 0 : index
    %0 = vector.load %arg2[%c0, %c0_0, %c0_1, %c0_2] : memref<1x1x112x36xbf16, #tpu.memory_space<vmem>>, vector<1x1x112x36xbf16>
    %1 = vector.shape_cast %0 : vector<1x1x112x36xbf16> to vector<112x36xbf16>
    %c0_3 = arith.constant 0 : index
    %c0_4 = arith.constant 0 : index
    %2 = vector.load %arg5[%c0_3, %c0_4] : memref<36x128xbf16, #tpu.memory_space<vmem>>, vector<36x128xbf16>
    %cst = arith.constant dense<0.000000e+00> : vector<112x128xf32>
    %3 = tpu.matmul %1, %2, %cst {dimension_numbers = #tpu.dot_dimension_numbers<[1], [0], [0], [1], [0, 0, 1, 1], [], []>} : vector<112x36xbf16>, vector<36x128xbf16>, vector<112x128xf32> -> vector<112x128xf32>
    %c0_5 = arith.constant 0 : index
    %c0_6 = arith.constant 0 : index
    %4 = vector.load %arg6[%c0_5, %c0_6] : memref<1x128xf32, #tpu.memory_space<vmem>>, vector<1x128xf32>
    %5 = vector.broadcast %4 : vector<1x128xf32> to vector<112x128xf32>
    %6 = arith.addf %3, %5 : vector<112x128xf32>
    %cst_7 = arith.constant 0.000000e+00 : f32
    %7 = vector.broadcast %cst_7 : f32 to vector<112x128xf32>
    %8 = arith.maximumf %6, %7 : vector<112x128xf32>
    %9 = vector.extract_strided_slice %8 {offsets = [0, 0], sizes = [56, 128], strides = [1, 1]} : vector<112x128xf32> to vector<56x128xf32>
    %10 = vector.extract_strided_slice %8 {offsets = [56, 0], sizes = [56, 128], strides = [1, 1]} : vector<112x128xf32> to vector<56x128xf32>
    %11 = arith.subf %9, %10 : vector<56x128xf32>
    %12 = arith.mulf %11, %11 : vector<56x128xf32>
    %13 = vector.shape_cast %12 : vector<56x128xf32> to vector<7x8x128xf32>
    %cst_8 = arith.constant dense<0.000000e+00> : vector<8x128xf32>
    %14 = vector.multi_reduction <add>, %13, %cst_8 [0] : vector<7x8x128xf32> to vector<8x128xf32>
    %15 = vector.shape_cast %14 : vector<8x128xf32> to vector<1x1x8x128xf32>
    %c0_9 = arith.constant 0 : index
    %c0_10 = arith.constant 0 : index
    %c0_11 = arith.constant 0 : index
    %c0_12 = arith.constant 0 : index
    %16 = vector.load %arg7[%c0_9, %c0_10, %c0_11, %c0_12] : memref<1x1x8x128xf32, #tpu.memory_space<vmem>>, vector<1x1x8x128xf32>
    tpu.vector_store %arg7[%c0_9, %c0_10, %c0_11, %c0_12], %15 {strides = array<i32>} : memref<1x1x8x128xf32, #tpu.memory_space<vmem>>, vector<1x1x8x128xf32>,
    %c0_13 = arith.constant 0 : index
    %c0_14 = arith.constant 0 : index
    %c0_15 = arith.constant 0 : index
    %c0_16 = arith.constant 0 : index
    %17 = vector.load %arg3[%c0_13, %c0_14, %c0_15, %c0_16] : memref<1x1x8x128xbf16, #tpu.memory_space<vmem>>, vector<1x1x8x128xbf16>
    %18 = vector.shape_cast %17 : vector<1x1x8x128xbf16> to vector<8x128xbf16>
    %19 = arith.extf %18 : vector<8x128xbf16> to vector<8x128xf32>
    %c0_17 = arith.constant 0 : index
    %c0_18 = arith.constant 0 : index
    %c0_19 = arith.constant 0 : index
    %c0_20 = arith.constant 0 : index
    %20 = vector.load %arg4[%c0_17, %c0_18, %c0_19, %c0_20] : memref<1x1x8x128xbf16, #tpu.memory_space<vmem>>, vector<1x1x8x128xbf16>
    %21 = vector.shape_cast %20 : vector<1x1x8x128xbf16> to vector<8x128xbf16>
    %22 = arith.extf %21 : vector<8x128xbf16> to vector<8x128xf32>
    %23 = arith.subf %19, %22 : vector<8x128xf32>
    %24 = math.absf %23 : vector<8x128xf32>
    %25 = vector.shape_cast %24 : vector<8x128xf32> to vector<1x8x128xf32>
    %cst_21 = arith.constant dense<0.000000e+00> : vector<8x128xf32>
    %26 = vector.multi_reduction <add>, %25, %cst_21 [0] : vector<1x8x128xf32> to vector<8x128xf32>
    %27 = vector.shape_cast %26 : vector<8x128xf32> to vector<1x1x8x128xf32>
    %c0_22 = arith.constant 0 : index
    %c0_23 = arith.constant 0 : index
    %c0_24 = arith.constant 0 : index
    %c0_25 = arith.constant 0 : index
    %28 = vector.load %arg8[%c0_22, %c0_23, %c0_24, %c0_25] : memref<1x1x8x128xf32, #tpu.memory_space<vmem>>, vector<1x1x8x128xf32>
    tpu.vector_store %arg8[%c0_22, %c0_23, %c0_24, %c0_25], %27 {strides = array<i32>} : memref<1x1x8x128xf32, #tpu.memory_space<vmem>>, vector<1x1x8x128xf32>,
    return
  }
  func.func @transform_0(%arg0: i32, %arg1: i32) -> (i32, i32, i32, i32) {
    %c0_i32 = arith.constant 0 : i32
    %c0_i32_0 = arith.constant 0 : i32
    %c0_i32_1 = arith.constant 0 : i32
    return %arg0, %arg1, %c0_i32, %c0_i32_0 : i32, i32, i32, i32
  }
  func.func @transform_1(%arg0: i32, %arg1: i32) -> (i32, i32, i32, i32) {
    %c0_i32 = arith.constant 0 : i32
    %c0_i32_0 = arith.constant 0 : i32
    %c0_i32_1 = arith.constant 0 : i32
    return %arg0, %arg1, %c0_i32, %c0_i32_0 : i32, i32, i32, i32
  }
  func.func @transform_2(%arg0: i32, %arg1: i32) -> (i32, i32, i32, i32) {
    %c0_i32 = arith.constant 0 : i32
    %c0_i32_0 = arith.constant 0 : i32
    %c0_i32_1 = arith.constant 0 : i32
    return %arg0, %arg1, %c0_i32, %c0_i32_0 : i32, i32, i32, i32
  }
  func.func @transform_3(%arg0: i32, %arg1: i32) -> (i32, i32) {
    %c0_i32 = arith.constant 0 : i32
    %c0_i32_0 = arith.constant 0 : i32
    %c0_i32_1 = arith.constant 0 : i32
    return %c0_i32, %c0_i32_0 : i32, i32
  }
  func.func @transform_4(%arg0: i32, %arg1: i32) -> (i32, i32) {
    %c0_i32 = arith.constant 0 : i32
    %c0_i32_0 = arith.constant 0 : i32
    %c0_i32_1 = arith.constant 0 : i32
    return %c0_i32, %c0_i32_0 : i32, i32
  }
  func.func @transform_5(%arg0: i32, %arg1: i32) -> (i32, i32, i32, i32) {
    %c0_i32 = arith.constant 0 : i32
    %c0_i32_0 = arith.constant 0 : i32
    %c0_i32_1 = arith.constant 0 : i32
    return %arg0, %arg1, %c0_i32, %c0_i32_0 : i32, i32, i32, i32
  }
  func.func @transform_6(%arg0: i32, %arg1: i32) -> (i32, i32, i32, i32) {
    %c0_i32 = arith.constant 0 : i32
    %c0_i32_0 = arith.constant 0 : i32
    %c0_i32_1 = arith.constant 0 : i32
    return %arg0, %arg1, %c0_i32, %c0_i32_0 : i32, i32, i32, i32
  }
}

</mosaic_0001>

<llo_original>
// kernel: combined_loss_forward.1
$region0: #{combined_loss_forward.1}
  #allocation0 [shape = 'u32[]', space=smem, size = 0x4, offset = 0x4, fixed_abs, tag = 'smem constant byte address 0x4 - core index']
  #allocation1 [shape = 'u32[144,128]{1,0:T(1,128)}', space=vmem, size = 0x12000, scoped, tag = 'internal scratch']
  %s0 = inlined_call_operand.vmem [shape: bf16[2,1,112,36], index: 0, kind: input, shape index: {}]
  %s1 = inlined_call_operand.vmem [shape: bf16[2,1,8,128], index: 1, kind: input, shape index: {}]
  %s2 = inlined_call_operand.vmem [shape: bf16[2,1,8,128], index: 2, kind: input, shape index: {}]
  %s3 = inlined_call_operand.vmem [shape: bf16[36,128], index: 3, kind: input, shape index: {}]
  %s4 = inlined_call_operand.vmem [shape: f32[1,128], index: 4, kind: input, shape index: {}]
  %s5 = inlined_call_operand.vmem [shape: f32[2,1,8,128], index: 5, kind: output, shape index: {0}]
  %s6 = inlined_call_operand.vmem [shape: f32[2,1,8,128], index: 6, kind: output, shape index: {1}]
  %7 = xla_tuple %s5, %s6
  %s8 = sld [smem:[#allocation0]]
  $region61: #{combined_loss_forward.1} parent=0
    _
  %s10 = ssub.s32 1, %s8
  %s11 = scalar_select 0, %s10, %s8
  loop: start=0, step=1, limit=4
  $region2: #{combined_loss_forward.1} parent=0 // loop_pre_header
    _
  $region3: #{combined_loss_forward.1} parent=0 // loop_header
    %s13 = sphi 0, %s17
    %p14 = scmp.ge.s32.totalorder %s13, 4
    %s20 = sphi 0, %s32
    %s21 = sphi 0, %s28
    %s22 = sphi 0, %s20
    %s23 = sphi 0, %s21
    %s24 = sphi 0, %s22
    %s25 = sphi 0, %s23
    %s37 = sphi 0, %s39
    %s40 = sphi 0, %s37
    %s41 = sphi 0, %s40
    %s57 = sphi 0, %s41
    %s65 = sphi 0, %s67
    %s68 = sphi 0, %s65
    %s69 = sphi 0, %s68
    %s85 = sphi 0, %s69
    %s93 = sphi 0, %s95
    %s96 = sphi 0, %s93
    %s97 = sphi 0, %s96
    %s113 = sphi 0, %s97
    %s117 = sphi 0, %s117
    %s119 = sphi 0, %s117
    %s120 = sphi 0, %s119
    %s134 = sphi 0, %s120
    %s138 = sphi 0, %s138
    %s140 = sphi 0, %s138
    %s141 = sphi 0, %s140
    %s155 = sphi 0, %s141
    %s163 = sphi 0, %s165
    %s166 = sphi 0, %s163
    %s167 = sphi 0, %s166
    %s183 = sphi 0, %s167
    %s191 = sphi 0, %s193
    %s194 = sphi 0, %s191
    %s195 = sphi 0, %s194
    %s211 = sphi 0, %s195
  $region4: #{combined_loss_forward.1} parent=0 // loop_header_branch
    %16 = sbr.rel (%p14) target = $region8
  $region5: #{combined_loss_forward.1} parent=0 // loop_body
    %s18 = ssub.s32 %s13, 1
    %s19 = ssub.s32 %s13, 2
    %s26 = sadd.s32 1, %s21
    %p27 = scmp.ge.s32.totalorder %s26, 1
    %s28 = scalar_select %p27, 0, %s26
    %s29 = sadd.s32 1, %s20
    %s30 = scalar_select %p27, %s29, %s20
    %p31 = scmp.ge.s32.totalorder %s30, 2
    %s32 = scalar_select %p31, 0, %s30
    %s33 = ssub.s32 %s20, %s32
    %s34 = ssub.s32 %s21, %s28
    %s35 = sor.u32 %s33, %s34
    %p36 = scmp.eq.s32.totalorder %s35, 0
    %s38 = sadd.s32 %s37, 1
    %s39 = scalar_select %p36, %s37, %s38
    %p42 = pneg %p36
    %p43 = scmp.eq.s32.totalorder %s13, 1
    %p44 = por %p42, %p43
    %p45 = scmp.ne.s32.totalorder %s37, %s40
    %p46 = scmp.eq.s32.totalorder %s13, 0
    %p47 = por %p45, %p46
    %p48 = scmp.ne.s32.totalorder %s37, %s40
    %p49 = scmp.eq.s32.totalorder %s18, 1
    %p50 = por %p48, %p49
    %p51 = scmp.ne.s32.totalorder %s40, %s41
    %p52 = scmp.eq.s32.totalorder %s18, 0
    %p53 = por %p51, %p52
    %p54 = scmp.ne.s32.totalorder %s40, %s41
    %p55 = scmp.eq.s32.totalorder %s19, 1
    %p56 = por %p54, %p55
    %p58 = scmp.ne.s32.totalorder %s41, %s57
    %p59 = scmp.eq.s32.totalorder %s19, 0
    %p60 = por %p58, %p59
    %s61 = ssub.s32 %s20, %s32
    %s62 = ssub.s32 %s21, %s28
    %s63 = sor.u32 %s61, %s62
    %p64 = scmp.eq.s32.totalorder %s63, 0
    %s66 = sadd.s32 %s65, 1
    %s67 = scalar_select %p64, %s65, %s66
    %p70 = pneg %p64
    %p71 = scmp.eq.s32.totalorder %s13, 1
    %p72 = por %p70, %p71
    %p73 = scmp.ne.s32.totalorder %s65, %s68
    %p74 = scmp.eq.s32.totalorder %s13, 0
    %p75 = por %p73, %p74
    %p76 = scmp.ne.s32.totalorder %s65, %s68
    %p77 = scmp.eq.s32.totalorder %s18, 1
    %p78 = por %p76, %p77
    %p79 = scmp.ne.s32.totalorder %s68, %s69
    %p80 = scmp.eq.s32.totalorder %s18, 0
    %p81 = por %p79, %p80
    %p82 = scmp.ne.s32.totalorder %s68, %s69
    %p83 = scmp.eq.s32.totalorder %s19, 1
    %p84 = por %p82, %p83
    %p86 = scmp.ne.s32.totalorder %s69, %s85
    %p87 = scmp.eq.s32.totalorder %s19, 0
    %p88 = por %p86, %p87
    %s89 = ssub.s32 %s20, %s32
    %s90 = ssub.s32 %s21, %s28
    %s91 = sor.u32 %s89, %s90
    %p92 = scmp.eq.s32.totalorder %s91, 0
    %s94 = sadd.s32 %s93, 1
    %s95 = scalar_select %p92, %s93, %s94
    %p98 = pneg %p92
    %p99 = scmp.eq.s32.totalorder %s13, 1
    %p100 = por %p98, %p99
    %p101 = scmp.ne.s32.totalorder %s93, %s96
    %p102 = scmp.eq.s32.totalorder %s13, 0
    %p103 = por %p101, %p102
    %p104 = scmp.ne.s32.totalorder %s93, %s96
    %p105 = scmp.eq.s32.totalorder %s18, 1
    %p106 = por %p104, %p105
    %p107 = scmp.ne.s32.totalorder %s96, %s97
    %p108 = scmp.eq.s32.totalorder %s18, 0
    %p109 = por %p107, %p108
    %p110 = scmp.ne.s32.totalorder %s96, %s97
    %p111 = scmp.eq.s32.totalorder %s19, 1
    %p112 = por %p110, %p111
    %p114 = scmp.ne.s32.totalorder %s97, %s113
    %p115 = scmp.eq.s32.totalorder %s19, 0
    %p116 = por %p114, %p115
    %s118 = sadd.s32 %s117, 1
    %p121 = scmp.eq.s32.totalorder %s13, 1
    %p122 = scmp.ne.s32.totalorder %s117, %s119
    %p123 = scmp.eq.s32.totalorder %s13, 0
    %p124 = por %p122, %p123
    %p125 = scmp.ne.s32.totalorder %s117, %s119
    %p126 = scmp.eq.s32.totalorder %s18, 1
    %p127 = por %p125, %p126
    %p128 = scmp.ne.s32.totalorder %s119, %s120
    %p129 = scmp.eq.s32.totalorder %s18, 0
    %p130 = por %p128, %p129
    %p131 = scmp.ne.s32.totalorder %s119, %s120
    %p132 = scmp.eq.s32.totalorder %s19, 1
    %p133 = por %p131, %p132
    %p135 = scmp.ne.s32.totalorder %s120, %s134
    %p136 = scmp.eq.s32.totalorder %s19, 0
    %p137 = por %p135, %p136
    %s139 = sadd.s32 %s138, 1
    %p142 = scmp.eq.s32.totalorder %s13, 1
    %p143 = scmp.ne.s32.totalorder %s138, %s140
    %p144 = scmp.eq.s32.totalorder %s13, 0
    %p145 = por %p143, %p144
    %p146 = scmp.ne.s32.totalorder %s138, %s140
    %p147 = scmp.eq.s32.totalorder %s18, 1
    %p148 = por %p146, %p147
    %p149 = scmp.ne.s32.totalorder %s140, %s141
    %p150 = scmp.eq.s32.totalorder %s18, 0
    %p151 = por %p149, %p150
    %p152 = scmp.ne.s32.totalorder %s140, %s141
    %p153 = scmp.eq.s32.totalorder %s19, 1
    %p154 = por %p152, %p153
    %p156 = scmp.ne.s32.totalorder %s141, %s155
    %p157 = scmp.eq.s32.totalorder %s19, 0
    %p158 = por %p156, %p157
    %s159 = ssub.s32 %s20, %s32
    %s160 = ssub.s32 %s21, %s28
    %s161 = sor.u32 %s159, %s160
    %p162 = scmp.eq.s32.totalorder %s161, 0
    %s164 = sadd.s32 %s163, 1
    %s165 = scalar_select %p162, %s163, %s164
    %p168 = pneg %p162
    %p169 = scmp.eq.s32.totalorder %s13, 1
    %p170 = por %p168, %p169
    %p171 = scmp.ne.s32.totalorder %s163, %s166
    %p172 = scmp.eq.s32.totalorder %s13, 0
    %p173 = por %p171, %p172
    %p174 = scmp.ne.s32.totalorder %s163, %s166
    %p175 = scmp.eq.s32.totalorder %s18, 1
    %p176 = por %p174, %p175
    %p177 = scmp.ne.s32.totalorder %s166, %s167
    %p178 = scmp.eq.s32.totalorder %s18, 0
    %p179 = por %p177, %p178
    %p180 = scmp.ne.s32.totalorder %s166, %s167
    %p181 = scmp.eq.s32.totalorder %s19, 1
    %p182 = por %p180, %p181
    %p184 = scmp.ne.s32.totalorder %s167, %s183
    %p185 = scmp.eq.s32.totalorder %s19, 0
    %p186 = por %p184, %p185
    %s187 = ssub.s32 %s20, %s32
    %s188 = ssub.s32 %s21, %s28
    %s189 = sor.u32 %s187, %s188
    %p190 = scmp.eq.s32.totalorder %s189, 0
    %s192 = sadd.s32 %s191, 1
    %s193 = scalar_select %p190, %s191, %s192
    %p196 = pneg %p190
    %p197 = scmp.eq.s32.totalorder %s13, 1
    %p198 = por %p196, %p197
    %p199 = scmp.ne.s32.totalorder %s191, %s194
    %p200 = scmp.eq.s32.totalorder %s13, 0
    %p201 = por %p199, %p200
    %p202 = scmp.ne.s32.totalorder %s191, %s194
    %p203 = scmp.eq.s32.totalorder %s18, 1
    %p204 = por %p202, %p203
    %p205 = scmp.ne.s32.totalorder %s194, %s195
    %p206 = scmp.eq.s32.totalorder %s18, 0
    %p207 = por %p205, %p206
    %p208 = scmp.ne.s32.totalorder %s194, %s195
    %p209 = scmp.eq.s32.totalorder %s19, 1
    %p210 = por %p208, %p209
    %p212 = scmp.ne.s32.totalorder %s195, %s211
    %p213 = scmp.eq.s32.totalorder %s19, 0
    %p214 = por %p212, %p213
    %p215 = scmp.le.s32.totalorder 1, %s13
    %p216 = scmp.lt.s32.totalorder %s13, 3
    %p217 = pnand %p215, %p216
    %p218 = pneg %p217
    // Predicated region
    $region9: #{combined_loss_forward.1} parent=5 // pred_check
      _
    $region10: #{combined_loss_forward.1} parent=5 // pred_check_branch
      %220 = sbr.rel (%p217) target = $region12
    $region11: #{combined_loss_forward.1} parent=5 // pred_region
      %s221 = ssub.s32 %s13, 1
      // Predicated region
      $region13: #{combined_loss_forward.1} parent=11 // pred_check
        %p222 = pneg %p130
      $region14: #{combined_loss_forward.1} parent=11 // pred_check_branch
        %224 = sbr.rel (%p222) target = $region16
      $region15: #{combined_loss_forward.1} parent=11 // pred_region
        _
      $region16: #{combined_loss_forward.1} parent=11 // pred_fallthru
        _
      // Predicated region
      $region17: #{combined_loss_forward.1} parent=11 // pred_check
        %p225 = pneg %p151
      $region18: #{combined_loss_forward.1} parent=11 // pred_check_branch
        %227 = sbr.rel (%p225) target = $region20
      $region19: #{combined_loss_forward.1} parent=11 // pred_region
        _
      $region20: #{combined_loss_forward.1} parent=11 // pred_fallthru
        _
    $region12: #{combined_loss_forward.1} parent=5 // pred_fallthru
      _
    %p228 = scmp.lt.s32.totalorder %s13, 2
    // Predicated region
    $region21: #{combined_loss_forward.1} parent=5 // pred_check
      %p229 = pneg %p228
    $region22: #{combined_loss_forward.1} parent=5 // pred_check_branch
      %231 = sbr.rel (%p229) target = $region24
    $region23: #{combined_loss_forward.1} parent=5 // pred_region
      // Predicated region
      $region25: #{combined_loss_forward.1} parent=23 // pred_check
        %p232 = pneg %p47
      $region26: #{combined_loss_forward.1} parent=23 // pred_check_branch
        %234 = sbr.rel (%p232) target = $region28
      $region27: #{combined_loss_forward.1} parent=23 // pred_region
        %p235 = scmp.lt.s32.totalorder %s20, 1
        %s236 = scalar_select %p235, %s20, 1
        %p237 = scmp.lt.s32.totalorder %s21, 0
        %s238 = scalar_select %p237, %s21, 0
        %s239 = smul.addr %s238, 14
        %s240 = smul.addr %s236, 14
        %s241 = sadd.s32 %s239, %s240
        %s242 = smul.addr %s241, 4
        %s243 = scalar_lea.vmem %s0, %s242
      $region28: #{combined_loss_forward.1} parent=23 // pred_fallthru
        _
      // Predicated region
      $region29: #{combined_loss_forward.1} parent=23 // pred_check
        %p244 = pneg %p75
      $region30: #{combined_loss_forward.1} parent=23 // pred_check_branch
        %246 = sbr.rel (%p244) target = $region32
      $region31: #{combined_loss_forward.1} parent=23 // pred_region
        %p247 = scmp.lt.s32.totalorder %s20, 1
        %s248 = scalar_select %p247, %s20, 1
        %p249 = scmp.lt.s32.totalorder %s21, 0
        %s250 = scalar_select %p249, %s21, 0
        %s251 = sadd.s32 %s250, %s248
        %s252 = smul.addr %s251, 4
        %s253 = scalar_lea.vmem %s1, %s252
      $region32: #{combined_loss_forward.1} parent=23 // pred_fallthru
        _
      // Predicated region
      $region33: #{combined_loss_forward.1} parent=23 // pred_check
        %p254 = pneg %p103
      $region34: #{combined_loss_forward.1} parent=23 // pred_check_branch
        %256 = sbr.rel (%p254) target = $region36
      $region35: #{combined_loss_forward.1} parent=23 // pred_region
        %p257 = scmp.lt.s32.totalorder %s20, 1
        %s258 = scalar_select %p257, %s20, 1
        %p259 = scmp.lt.s32.totalorder %s21, 0
        %s260 = scalar_select %p259, %s21, 0
        %s261 = sadd.s32 %s260, %s258
        %s262 = smul.addr %s261, 4
        %s263 = scalar_lea.vmem %s2, %s262
      $region36: #{combined_loss_forward.1} parent=23 // pred_fallthru
        _
    $region24: #{combined_loss_forward.1} parent=5 // pred_fallthru
      _
    %p264 = scmp.le.s32.totalorder 1, %s13
    %p265 = scmp.lt.s32.totalorder %s13, 3
    %p266 = pnand %p264, %p265
    %p267 = pneg %p266
    // Predicated region
    $region37: #{combined_loss_forward.1} parent=5 // pred_check
      _
    $region38: #{combined_loss_forward.1} parent=5 // pred_check_branch
      %269 = sbr.rel (%p266) target = $region40
    $region39: #{combined_loss_forward.1} parent=5 // pred_region
      %s270 = ssub.s32 %s13, 1
      %p271 = scmp.lt.s32.totalorder %s22, 1
      %s272 = scalar_select %p271, %s22, 1
      %p273 = scmp.lt.s32.totalorder %s23, 0
      %s274 = scalar_select %p273, %s23, 0
      %s275 = smul.addr %s274, 14
      %s276 = smul.addr %s272, 14
      %s277 = sadd.s32 %s275, %s276
      %s278 = smul.addr %s277, 4
      %s279 = scalar_lea.vmem %s0, %s278
      %p280 = pneg %p53
      %p281 = pneg %p50
      %p282 = scmp.lt.s32.totalorder %s22, 1
      %s283 = scalar_select %p282, %s22, 1
      %p284 = scmp.lt.s32.totalorder %s23, 0
      %s285 = scalar_select %p284, %s23, 0
      %s286 = sadd.s32 %s285, %s283
      %s287 = smul.addr %s286, 4
      %s288 = scalar_lea.vmem %s1, %s287
      %p289 = pneg %p81
      %p290 = pneg %p78
      %p291 = scmp.lt.s32.totalorder %s22, 1
      %s292 = scalar_select %p291, %s22, 1
      %p293 = scmp.lt.s32.totalorder %s23, 0
      %s294 = scalar_select %p293, %s23, 0
      %s295 = sadd.s32 %s294, %s292
      %s296 = smul.addr %s295, 4
      %s297 = scalar_lea.vmem %s2, %s296
      %p298 = pneg %p109
      %p299 = pneg %p106
      %p300 = pneg %p130
      %p301 = pneg %p127
      %p302 = pneg %p151
      %p303 = pneg %p148
      %p304 = pneg %p179
      %p305 = pneg %p176
      %p306 = scmp.lt.s32.totalorder %s22, 1
      %s307 = scalar_select %p306, %s22, 1
      %p308 = scmp.lt.s32.totalorder %s23, 0
      %s309 = scalar_select %p308, %s23, 0
      %s310 = sadd.s32 %s309, %s307
      %s311 = smul.addr %s310, 8
      %s312 = scalar_lea.vmem %s5, %s311
      %p313 = pneg %p207
      %p314 = pneg %p204
      %p315 = scmp.lt.s32.totalorder %s22, 1
      %s316 = scalar_select %p315, %s22, 1
      %p317 = scmp.lt.s32.totalorder %s23, 0
      %s318 = scalar_select %p317, %s23, 0
      %s319 = sadd.s32 %s318, %s316
      %s320 = smul.addr %s319, 8
      %s321 = scalar_lea.vmem %s6, %s320
      %p322 = scmp.lt.s32.totalorder %s22, 1
      %s323 = scalar_select %p322, %s22, 1
      %p324 = scmp.lt.s32.totalorder %s23, 0
      %s325 = scalar_select %p324, %s23, 0
      %s326 = smul.addr %s325, 14
      %s327 = smul.addr %s323, 14
      %s328 = sadd.s32 %s326, %s327
      %s329 = smul.addr %s328, 4
      %s330 = scalar_lea.vmem %s0, %s329
      %p331 = scmp.lt.s32.totalorder %s22, 1
      %s332 = scalar_select %p331, %s22, 1
      %p333 = scmp.lt.s32.totalorder %s23, 0
      %s334 = scalar_select %p333, %s23, 0
      %s335 = sadd.s32 %s334, %s332
      %s336 = smul.addr %s335, 4
      %s337 = scalar_lea.vmem %s1, %s336
      %p338 = scmp.lt.s32.totalorder %s22, 1
      %s339 = scalar_select %p338, %s22, 1
      %p340 = scmp.lt.s32.totalorder %s23, 0
      %s341 = scalar_select %p340, %s23, 0
      %s342 = sadd.s32 %s341, %s339
      %s343 = smul.addr %s342, 4
      %s344 = scalar_lea.vmem %s2, %s343
      %p345 = scmp.lt.s32.totalorder %s22, 1
      %s346 = scalar_select %p345, %s22, 1
      %p347 = scmp.lt.s32.totalorder %s23, 0
      %s348 = scalar_select %p347, %s23, 0
      %s349 = sadd.s32 %s348, %s346
      %s350 = smul.addr %s349, 8
      %s351 = scalar_lea.vmem %s5, %s350
      %p352 = scmp.lt.s32.totalorder %s22, 1
      %s353 = scalar_select %p352, %s22, 1
      %p354 = scmp.lt.s32.totalorder %s23, 0
      %s355 = scalar_select %p354, %s23, 0
      %s356 = sadd.s32 %s355, %s353
      %s357 = smul.addr %s356, 8
      %s358 = scalar_lea.vmem %s6, %s357
      %v360 = vld [vmem:[%s330] sm:$0xf]
      %v361 = vld [vmem:[%s330 + $0x4] sm:$0xf]
      %v362 = vld [vmem:[%s330 + $0x8] sm:$0xf]
      %v363 = vld [vmem:[%s330 + $0xc] sm:$0xf]
      %v364 = vld [vmem:[%s330 + $0x10] sm:$0xf]
      %v365 = vld [vmem:[%s330 + $0x14] sm:$0xf]
      %v366 = vld [vmem:[%s330 + $0x18] sm:$0xf]
      %v367 = vld [vmem:[%s330 + $0x1c] sm:$0xf]
      %v368 = vld [vmem:[%s330 + $0x20] sm:$0xf]
      %v369 = vld [vmem:[%s330 + $0x24] sm:$0xf]
      %v370 = vld [vmem:[%s330 + $0x28] sm:$0xf]
      %v371 = vld [vmem:[%s330 + $0x2c] sm:$0xf]
      %v372 = vld [vmem:[%s330 + $0x30] sm:$0xf]
      %v373 = vld [vmem:[%s330 + $0x34] sm:$0xf]
      %v374 = vld [vmem:[%s3] sm:$0xf]
      %v375 = vld [vmem:[%s3 + $0x4] sm:$0xf]
      %v376 = vld [vmem:[%s3 + $0x8] sm:$0xf]
      %v377 = vld [vmem:[%s3 + $0xc] sm:$0xf]
      %v378 = vld [vmem:[%s3 + $0x10] sm:$0x3]
      %v379 = vld [vmem:[%s4] sm:$0x1]
      %v381 = vlaneseq
      %v382 = vshrl.u32 %v381, 7
      %v383 = vsub.s32 0, %v382
      %v384 = vrot.slane %v379, %v383
      %v400 = vunpack.c.l.b16 %v360
      %v401 = vunpack.c.l.b16 %v361
      %v402 = vunpack.c.l.b16 %v362
      %v403 = vunpack.c.l.b16 %v363
      %v404 = vunpack.c.l.b16 %v364
      %v405 = vunpack.c.l.b16 %v365
      %v406 = vunpack.c.l.b16 %v366
      %v407 = vunpack.c.l.b16 %v367
      %v408 = vunpack.c.l.b16 %v368
      %v409 = vunpack.c.l.b16 %v369
      %v410 = vunpack.c.l.b16 %v370
      %v411 = vunpack.c.l.b16 %v371
      %v412 = vunpack.c.l.b16 %v372
      %v413 = vunpack.c.l.b16 %v373
      %v414 = vpack.c.b16 %v401, %v400
      %v415 = vpack.c.b16 %v403, %v402
      %v416 = vpack.c.b16 %v405, %v404
      %v417 = vpack.c.b16 %v407, %v406
      %v418 = vpack.c.b16 %v409, %v408
      %v419 = vpack.c.b16 %v411, %v410
      %v420 = vpack.c.b16 %v413, %v412
      %v426 = vunpack.c.l.b16 %v374
      %v427 = vunpack.c.l.b16 %v375
      %v428 = vunpack.c.l.b16 %v376
      %v429 = vunpack.c.l.b16 %v377
      %v430 = vunpack.c.l.b16 %v378
      %v431 = vpack.c.b16 %v427, %v426
      %v432 = vpack.c.b16 %v429, %v428
      %v433 = vpack.c.b16 %v430, %v430
      %vm436 = vcmask 293888
      %v438 = vsel %vm436, %v414, 0
      %v441 = vsel %vm436, %v415, 0
      %v444 = vsel %vm436, %v416, 0
      %v447 = vsel %vm436, %v417, 0
      %v450 = vsel %vm436, %v418, 0
      %v453 = vsel %vm436, %v419, 0
      %v456 = vsel %vm436, %v420, 0
      %vm458 = vcmask 1041408
      %v460 = vsel %vm458, %v433, 0
      %462 = vmatprep.subr.bf16.mxu0 0
      %463 = vmatpush1.bf16.msra.mxu0 0
      %464 = vmatprep.subr.bf16.mxu0 0
      %465 = vmatpush1.bf16.msra.mxu0 0
      %466 = vmatprep.subr.bf16.mxu0 0
      %467 = vmatpush1.bf16.msra.mxu0 0
      %468 = vmatprep.subr.bf16.mxu0 0
      %469 = vmatpush1.bf16.msra.mxu0 0
      %470 = vmatprep.subr.bf16.mxu0 0
      %471 = vmatpush1.bf16.msra.mxu0 0
      %472 = vmatprep.subr.bf16.mxu0 0
      %473 = vmatpush1.bf16.msra.mxu0 %v460
      %474 = vmatprep.subr.bf16.mxu0 0
      %475 = vmatpush1.bf16.msra.mxu0 %v432
      %476 = vmatprep.subr.bf16.mxu0 0
      %477 = vmatpush1.bf16.msra.mxu0 %v431
      %478 = vmatprep.subr.bf16.mxu0 0
      %479 = vmatpush2.bf16.msra.mxu0 0
      %480 = vmatprep.subr.bf16.mxu0 0
      %481 = vmatpush2.bf16.msra.mxu0 0
      %482 = vmatprep.subr.bf16.mxu0 0
      %483 = vmatpush2.bf16.msra.mxu0 0
      %484 = vmatprep.subr.bf16.mxu0 0
      %485 = vmatpush2.bf16.msra.mxu0 0
      %486 = vmatprep.subr.bf16.mxu0 0
      %487 = vmatpush2.bf16.msra.mxu0 0
      %488 = vmatprep.subr.bf16.mxu0 0
      %489 = vmatpush2.bf16.msra.mxu0 0
      %490 = vmatprep.subr.bf16.mxu0 0
      %491 = vmatpush2.bf16.msra.mxu0 0
      %492 = vmatprep.subr.bf16.mxu0 0
      %493 = vmatpush2.bf16.msra.mxu0 0
      %494 = vmatprep.mubr.bf16.mxu0 0
      %495 = vmatmul.mubr.bf16.gmra.mxu0 %v438
      %v496 = vpop.f32.mrf.mxu0
      %v497 = vadd.f32 %v384, %v496
      %v498 = vpop.f32.mrf.mxu0
      %v499 = vpop.f32.mrf.mxu0
      %v500 = vadd.f32 %v384, %v499
      %v501 = vpop.f32.mrf.mxu0
      %502 = vmatprep.mubr.bf16.mxu0 0
      %503 = vmatmul.mubr.bf16.gmra.mxu0 %v441
      %v504 = vpop.f32.mrf.mxu0
      %v505 = vadd.f32 %v384, %v504
      %v506 = vpop.f32.mrf.mxu0
      %v507 = vpop.f32.mrf.mxu0
      %v508 = vadd.f32 %v384, %v507
      %v509 = vpop.f32.mrf.mxu0
      %510 = vmatprep.mubr.bf16.mxu0 0
      %511 = vmatmul.mubr.bf16.gmra.mxu0 %v444
      %v512 = vpop.f32.mrf.mxu0
      %v513 = vadd.f32 %v384, %v512
      %v514 = vpop.f32.mrf.mxu0
      %v515 = vpop.f32.mrf.mxu0
      %v516 = vadd.f32 %v384, %v515
      %v517 = vpop.f32.mrf.mxu0
      %518 = vmatprep.mubr.bf16.mxu0 0
      %519 = vmatmul.mubr.bf16.gmra.mxu0 %v447
      %v520 = vpop.f32.mrf.mxu0
      %v521 = vadd.f32 %v384, %v520
      %v522 = vpop.f32.mrf.mxu0
      %v523 = vpop.f32.mrf.mxu0
      %v524 = vadd.f32 %v384, %v523
      %v525 = vpop.f32.mrf.mxu0
      %526 = vmatprep.mubr.bf16.mxu0 0
      %527 = vmatmul.mubr.bf16.gmra.mxu0 %v450
      %v528 = vpop.f32.mrf.mxu0
      %v529 = vadd.f32 %v384, %v528
      %v530 = vpop.f32.mrf.mxu0
      %v531 = vpop.f32.mrf.mxu0
      %v532 = vadd.f32 %v384, %v531
      %v533 = vpop.f32.mrf.mxu0
      %534 = vmatprep.mubr.bf16.mxu0 0
      %535 = vmatmul.mubr.bf16.gmra.mxu0 %v453
      %v536 = vpop.f32.mrf.mxu0
      %v537 = vadd.f32 %v384, %v536
      %v538 = vpop.f32.mrf.mxu0
      %v539 = vpop.f32.mrf.mxu0
      %v540 = vadd.f32 %v384, %v539
      %v541 = vpop.f32.mrf.mxu0
      %542 = vmatprep.mubr.bf16.mxu0 0
      %543 = vmatmul.mubr.bf16.gmra.mxu0 %v456
      %v544 = vpop.f32.mrf.mxu0
      %v545 = vadd.f32 %v384, %v544
      %v546 = vpop.f32.mrf.mxu0
      %v547 = vpop.f32.mrf.mxu0
      %v548 = vadd.f32 %v384, %v547
      %v549 = vpop.f32.mrf.mxu0
      %550 = vdwg.mxu0
      %v551 = vmax.f32 %v497, 0.0
      %v552 = vmax.f32 %v500, 0.0
      %v553 = vmax.f32 %v505, 0.0
      %v554 = vmax.f32 %v508, 0.0
      %v555 = vmax.f32 %v513, 0.0
      %v556 = vmax.f32 %v516, 0.0
      %v557 = vmax.f32 %v521, 0.0
      %v558 = vmax.f32 %v524, 0.0
      %v559 = vmax.f32 %v529, 0.0
      %v560 = vmax.f32 %v532, 0.0
      %v561 = vmax.f32 %v537, 0.0
      %v562 = vmax.f32 %v540, 0.0
      %v563 = vmax.f32 %v545, 0.0
      %v564 = vmax.f32 %v548, 0.0
      %v565 = vsub.f32 %v551, %v558
      %v566 = vsub.f32 %v552, %v559
      %v567 = vsub.f32 %v553, %v560
      %v568 = vsub.f32 %v554, %v561
      %v569 = vsub.f32 %v555, %v562
      %v570 = vsub.f32 %v556, %v563
      %v571 = vsub.f32 %v557, %v564
      %v572 = vmul.f32 %v565, %v565
      %v573 = vmul.f32 %v566, %v566
      %v574 = vmul.f32 %v567, %v567
      %v575 = vmul.f32 %v568, %v568
      %v576 = vmul.f32 %v569, %v569
      %v577 = vmul.f32 %v570, %v570
      %v578 = vmul.f32 %v571, %v571
      %v579 = vadd.f32 %v572, %v573
      %v580 = vadd.f32 %v579, %v574
      %v581 = vadd.f32 %v580, %v575
      %v582 = vadd.f32 %v581, %v576
      %v583 = vadd.f32 %v582, %v577
      %v584 = vadd.f32 %v583, %v578
      %585 = vst [vmem:[%s351] sm:$0xff] %v584
      %v586 = vld [vmem:[%s337] sm:$0xf]
      %v587 = vunpack.c.l.bf16 %v586
      %v588 = vld [vmem:[%s344] sm:$0xf]
      %v589 = vunpack.c.l.bf16 %v588
      %v590 = vsub.f32 %v587, %v589
      %v591 = vand.u32 2147483647, %v590
      %v592 = vadd.f32 %v591, 0.0
      %593 = vst [vmem:[%s358] sm:$0xff] %v592
      %p594 = scmp.lt.s32.totalorder %s22, 1
      %s595 = scalar_select %p594, %s22, 1
      %p596 = scmp.lt.s32.totalorder %s23, 0
      %s597 = scalar_select %p596, %s23, 0
      %s598 = sadd.s32 %s597, %s595
      %s599 = smul.addr %s598, 8
      %s600 = scalar_lea.vmem %s5, %s599
      %p601 = scmp.lt.s32.totalorder %s22, 1
      %s602 = scalar_select %p601, %s22, 1
      %p603 = scmp.lt.s32.totalorder %s23, 0
      %s604 = scalar_select %p603, %s23, 0
      %s605 = sadd.s32 %s604, %s602
      %s606 = smul.addr %s605, 8
      %s607 = scalar_lea.vmem %s6, %s606
      // Predicated region
      $region41: #{combined_loss_forward.1} parent=39 // pred_check
        %p608 = pneg %p176
      $region42: #{combined_loss_forward.1} parent=39 // pred_check_branch
        %610 = sbr.rel (%p608) target = $region44
      $region43: #{combined_loss_forward.1} parent=39 // pred_region
        _
      $region44: #{combined_loss_forward.1} parent=39 // pred_fallthru
        _
      // Predicated region
      $region45: #{combined_loss_forward.1} parent=39 // pred_check
        %p611 = pneg %p204
      $region46: #{combined_loss_forward.1} parent=39 // pred_check_branch
        %613 = sbr.rel (%p611) target = $region48
      $region47: #{combined_loss_forward.1} parent=39 // pred_region
        _
      $region48: #{combined_loss_forward.1} parent=39 // pred_fallthru
        _
    $region40: #{combined_loss_forward.1} parent=5 // pred_fallthru
      _
    %p614 = scmp.le.s32.totalorder 2, %s13
    // Predicated region
    $region49: #{combined_loss_forward.1} parent=5 // pred_check
      %p615 = pneg %p614
    $region50: #{combined_loss_forward.1} parent=5 // pred_check_branch
      %617 = sbr.rel (%p615) target = $region52
    $region51: #{combined_loss_forward.1} parent=5 // pred_region
      %s618 = ssub.s32 %s13, 2
      // Predicated region
      $region53: #{combined_loss_forward.1} parent=51 // pred_check
        %p619 = pneg %p182
      $region54: #{combined_loss_forward.1} parent=51 // pred_check_branch
        %621 = sbr.rel (%p619) target = $region56
      $region55: #{combined_loss_forward.1} parent=51 // pred_region
        %p622 = scmp.lt.s32.totalorder %s24, 1
        %s623 = scalar_select %p622, %s24, 1
        %p624 = scmp.lt.s32.totalorder %s25, 0
        %s625 = scalar_select %p624, %s25, 0
        %s626 = sadd.s32 %s625, %s623
        %s627 = smul.addr %s626, 8
        %s628 = scalar_lea.vmem %s5, %s627
      $region56: #{combined_loss_forward.1} parent=51 // pred_fallthru
        _
      // Predicated region
      $region57: #{combined_loss_forward.1} parent=51 // pred_check
        %p629 = pneg %p210
      $region58: #{combined_loss_forward.1} parent=51 // pred_check_branch
        %631 = sbr.rel (%p629) target = $region60
      $region59: #{combined_loss_forward.1} parent=51 // pred_region
        %p632 = scmp.lt.s32.totalorder %s24, 1
        %s633 = scalar_select %p632, %s24, 1
        %p634 = scmp.lt.s32.totalorder %s25, 0
        %s635 = scalar_select %p634, %s25, 0
        %s636 = sadd.s32 %s635, %s633
        %s637 = smul.addr %s636, 8
        %s638 = scalar_lea.vmem %s6, %s637
      $region60: #{combined_loss_forward.1} parent=51 // pred_fallthru
        _
    $region52: #{combined_loss_forward.1} parent=5 // pred_fallthru
      _
  $region6: #{combined_loss_forward.1} parent=0 // loop_footer
    %s17 = sadd.s32 1, %s13
  $region7: #{combined_loss_forward.1} parent=0 // loop_footer_branch
    %12 = sbr.rel target = $region3
  $region8: #{combined_loss_forward.1} parent=0 // loop_exit
    _

</llo_original>
